<compile_context>
chip_gen: v5e
topology: v5e:2x2
jax: 0.10.0
libtpu: 0.0.40
codegen_flags: <defaults>
</compile_context>

<pallas_src>
import jax
import jax.numpy as jnp
from jax.experimental import pallas as pl
from jax.experimental.pallas import tpu as pltpu


def _ru(x, m):
    return ((x + m - 1) // m) * m


def _device_kind():
    try:
        return jax.devices()[0].device_kind.lower()
    except Exception:
        return ""


def _vmem_capacity_bytes():
    """Physical VMEM per TensorCore (64 MiB on v7x, 128 MiB on v5e/v6e)."""
    try:
        cap = int(pltpu.get_tpu_info().vmem_capacity_bytes)
        if cap > 0:
            return cap
    except Exception:
        pass
    return (64 << 20) if "v7" in _device_kind() else (128 << 20)


# -----------------------------------------------------------------------------
# Kernels
# -----------------------------------------------------------------------------

def fusion_kernel_fold(vis_ref, txt_ref, wvp_ref, bv_ref, wt_ref, bt_ref,
                       wav_ref, wat_ref, ba_ref, out_ref):
    """Fast path: spatial average pool folded into the vis_proj MXU contraction.

    vis_ref : (tm, C*HW) lane-dense view of NCHW visual features.
    wvp_ref : (C*HW, C) = repeat(Wv, HW, axis=0)/HW, so
              vis_flat @ Wv_pool == mean_hw(vis) @ Wv (up to f32 summation order).
    """
    vis = vis_ref[...]
    txt = txt_ref[...]
    vis_p = jnp.maximum(
        jnp.dot(vis, wvp_ref[...].astype(vis.dtype),
                preferred_element_type=jnp.float32) + bv_ref[...], 0.0)
    txt_p = jnp.maximum(
        jnp.dot(txt, wt_ref[...].astype(txt.dtype),
                preferred_element_type=jnp.float32) + bt_ref[...], 0.0)
    # alpha over concat(vis_p, txt_p): split-weight form,
    #   concat(v, t) @ Wa == v @ Wa_vis + t @ Wa_txt  (avoids in-kernel lane concat)
    alpha = jax.nn.sigmoid(
        jnp.dot(vis_p, wav_ref[...], preferred_element_type=jnp.float32)
        + jnp.dot(txt_p, wat_ref[...], preferred_element_type=jnp.float32)
        + ba_ref[...])
    # TODO(synk): training-mode dropout (pltpu.prng_random_bits mask) not applied;
    # eval-mode dropout is the identity, which is what we reproduce here.
    out_ref[...] = (alpha * vis_p + (1.0 - alpha) * txt_p).astype(out_ref.dtype)


def fusion_kernel_mean(vis_ref, txt_ref, wv_ref, bv_ref, wt_ref, bt_ref,
                       wav_ref, wat_ref, ba_ref, out_ref):
    """Fallback path: in-kernel spatial mean (XLU, f32 accumulation) + K=C matmul.

    Used when the folded (C*HW, C) weight would be too large to keep resident,
    or on v5e with f32 inputs and large C (f32 MXU-ceiling guard).
    """
    vis = vis_ref[...]                                        # (tm, C, HW)
    txt = txt_ref[...]
    pooled = jnp.mean(vis.astype(jnp.float32), axis=-1)       # (tm, C), f32
    vis_p = jnp.maximum(
        jnp.dot(pooled, wv_ref[...], preferred_element_type=jnp.float32)
        + bv_ref[...], 0.0)
    txt_p = jnp.maximum(
        jnp.dot(txt, wt_ref[...].astype(txt.dtype),
                preferred_element_type=jnp.float32) + bt_ref[...], 0.0)
    alpha = jax.nn.sigmoid(
        jnp.dot(vis_p, wav_ref[...], preferred_element_type=jnp.float32)
        + jnp.dot(txt_p, wat_ref[...], preferred_element_type=jnp.float32)
        + ba_ref[...])
    out_ref[...] = (alpha * vis_p + (1.0 - alpha) * txt_p).astype(out_ref.dtype)


# -----------------------------------------------------------------------------
# Wrapper
# -----------------------------------------------------------------------------

def multimodal_fusion(visual_feat, textual_feat, params, *, tm=512,
                      force_mean_pool=False):
    """visual_feat: (B, N, C, H, W), textual_feat: (B, N, C) -> (B, N, C).

    Inputs may be f32 or bf16 (pass bf16 straight from the producer to halve
    HBM traffic; accumulation is f32 either way). Output dtype follows
    textual_feat.dtype.
    """
    B, N, C, H, W = visual_feat.shape
    M, HW = B * N, H * W
    CHW = C * HW
    wv, bv, wt, bt, wa_v, wa_t, ba = params
    out_dtype = textual_feat.dtype

    vis_item = jnp.dtype(visual_feat.dtype).itemsize
    txt_item = jnp.dtype(textual_feat.dtype).itemsize
    out_item = jnp.dtype(out_dtype).itemsize

    physical_vmem = _vmem_capacity_bytes()
    kind = _device_kind()
    is_v5e = ("v5 lite" in kind) or ("v5e" in kind) or ("v5lite" in kind)

    # --- choose pooling path --------------------------------------------------
    wvp_resident = 2 * _ru(CHW, 8) * _ru(C, 128) * 4          # double-buffered, padded
    fold_ok = wvp_resident <= max(physical_vmem // 8, 4 << 20)
    # v5e f32-MXU-ceiling guard: the K=C*HW f32 contraction is ~C/2 flops per
    # visual byte, which outruns v5e's f32 matmul throughput roughly beyond C~96.
    if fold_ok and is_v5e and vis_item >= 4 and C > 96:
        fold_ok = False
    if force_mean_pool:
        fold_ok = False

    # --- (8,128)-padding-aware VMEM accounting ---------------------------------
    if fold_ok:
        per_row = (_ru(CHW, 128) * vis_item
                   + _ru(C, 128) * (txt_item + out_item))
        fixed = (_ru(CHW, 8) * _ru(C, 128) * 4                # Wv_pool (f32)
                 + 3 * _ru(C, 8) * _ru(C, 128) * 4            # Wt, Wa_v, Wa_t
                 + 3 * 8 * _ru(C, 128) * 4)                   # biases
    else:
        per_row = (_ru(C, 8) * _ru(HW, 128) * vis_item
                   + _ru(C, 128) * (txt_item + out_item))
        fixed = (4 * _ru(C, 8) * _ru(C, 128) * 4
                 + 3 * 8 * _ru(C, 128) * 4)

    # Row tile: ~35% of physical VMEM (<=40 MiB) for the double-buffered stream.
    budget = min(int(physical_vmem * 0.35), 40 << 20)
    avail = max(budget - 2 * fixed, 2 * per_row * 8)
    tm_fit = avail // (2 * per_row)
    tm = max(8, min(tm, (tm_fit // 8) * 8))
    m_pad = _ru(M, 8)
    half_cap = max(8, _ru((M + 1) // 2, 8))    # >=2 grid steps -> both TCs get work
    tm = min(tm, m_pad, half_cap)

    grid = (pl.cdiv(M, tm),)   # ragged tail handled by Pallas block clipping

    # Always set the scoped-VMEM limit explicitly (v5e default is only 16 MiB);
    # padded estimate * 1.5 + slack, capped at 3/4 of physical (48 MiB on v7x).
    est_vmem = 2 * fixed + 2 * tm * per_row + 4 * tm * _ru(C, 128) * 4
    vmem_limit = int(min(max(est_vmem * 3 // 2 + (8 << 20), 32 << 20),
                         physical_vmem * 3 // 4))

    # TODO(synk): for very large C (>=1024) the resident (C,C) weights are still
    # double-buffered by the pipeline; single-buffering them would free VMEM
    # for larger visual tiles on v7x.

    txt_rows = textual_feat.reshape(M, C)
    if fold_ok:
        kernel = fusion_kernel_fold
        vis_in = visual_feat.reshape(M, CHW)                  # free, lane-dense view
        # Pooling folded into the projection weight (tiny; cache it in a real model).
        w_vis = jnp.repeat(wv, HW, axis=0) * (1.0 / HW)       # (C*HW, C), f32
        vis_spec = pl.BlockSpec((tm, CHW), lambda i: (i, 0))
        wv_spec = pl.BlockSpec((CHW, C), lambda i: (0, 0))
    else:
        kernel = fusion_kernel_mean
        vis_in = visual_feat.reshape(M, C, HW)                # free NCHW view
        w_vis = wv
        vis_spec = pl.BlockSpec((tm, C, HW), lambda i: (i, 0, 0))
        wv_spec = pl.BlockSpec((C, C), lambda i: (0, 0))

    out = pl.pallas_call(
        kernel,
        out_shape=jax.ShapeDtypeStruct((M, C), out_dtype),
        grid=grid,
        in_specs=[
            vis_spec,                                         # visual
            pl.BlockSpec((tm, C), lambda i: (i, 0)),          # textual
            wv_spec,                                          # Wv / Wv_pool
            pl.BlockSpec((1, C), lambda i: (0, 0)),           # bv
            pl.BlockSpec((C, C), lambda i: (0, 0)),           # Wt
            pl.BlockSpec((1, C), lambda i: (0, 0)),           # bt
            pl.BlockSpec((C, C), lambda i: (0, 0)),           # Wa (visual half)
            pl.BlockSpec((C, C), lambda i: (0, 0)),           # Wa (textual half)
            pl.BlockSpec((1, C), lambda i: (0, 0)),           # ba
        ],
        out_specs=pl.BlockSpec((tm, C), lambda i: (i, 0)),
        compiler_params=pltpu.CompilerParams(
            dimension_semantics=("parallel",),
            vmem_limit_bytes=vmem_limit),
    )(vis_in, txt_rows, w_vis, bv, wt, bt, wa_v, wa_t, ba)

    return out.reshape(B, N, C)


# -----------------------------------------------------------------------------
# Reference & params
# -----------------------------------------------------------------------------

def reference_fusion(visual_feat, textual_feat, params):
    """Plain-JAX reference of the PyTorch forward (Weighted, with_extra_fc, eval)."""
    B, N, C, H, W = visual_feat.shape
    wv, bv, wt, bt, wa_v, wa_t, ba = params
    hi = jax.lax.Precision.HIGHEST
    v32 = visual_feat.astype(jnp.float32)
    t32 = textual_feat.astype(jnp.float32)
    pooled = jnp.mean(v32.reshape(B * N, C, H * W), axis=-1).reshape(B, N, C)
    vis_p = jax.nn.relu(jnp.dot(pooled, wv, precision=hi) + bv)
    txt_p = jax.nn.relu(jnp.dot(t32, wt, precision=hi) + bt)
    alpha = jax.nn.sigmoid(jnp.dot(vis_p, wa_v, precision=hi)
                           + jnp.dot(txt_p, wa_t, precision=hi) + ba)
    return alpha * vis_p + (1.0 - alpha) * txt_p


def init_params(key, C):
    """Deterministic synthetic Linear params, stored as (in, out) so x @ W == nn.Linear."""
    ks = jax.random.split(key, 7)
    s = 1.0 / jnp.sqrt(C)
    wv = jax.random.uniform(ks[0], (C, C), jnp.float32, -s, s)
    bv = jax.random.uniform(ks[1], (1, C), jnp.float32, -s, s)
    wt = jax.random.uniform(ks[2], (C, C), jnp.float32, -s, s)
    bt = jax.random.uniform(ks[3], (1, C), jnp.float32, -s, s)
    # alpha_proj: Linear(2C -> C); split its (2C, C) weight into visual / textual halves.
    sa = 1.0 / jnp.sqrt(2 * C)
    wa_v = jax.random.uniform(ks[4], (C, C), jnp.float32, -sa, sa)
    wa_t = jax.random.uniform(ks[5], (C, C), jnp.float32, -sa, sa)
    ba = jax.random.uniform(ks[6], (1, C), jnp.float32, -sa, sa)
    return (wv, bv, wt, bt, wa_v, wa_t, ba)


if __name__ == "__main__":
    key = jax.random.PRNGKey(0)
    k_vis, k_txt, k_par = jax.random.split(key, 3)

    B, N, C, H, W = 2, 4, 32, 8, 8
    visual_feat = jax.random.normal(k_vis, (B, N, C, H, W), jnp.float32)
    textual_feat = jax.random.normal(k_txt, (B, N, C), jnp.float32)
    params = init_params(k_par, C)
    ref = reference_fusion(visual_feat, textual_feat, params)

    # 1) f32, MXU-folded pooling path (the fast path).
    out = jax.block_until_ready(multimodal_fusion(visual_feat, textual_feat, params))
    assert out.shape == (B, N, C)
    assert jnp.allclose(out, ref, atol=1e-5, rtol=1e-5)

    # 2) Fallback in-kernel mean path (used for very large C*HW / v5e-f32-large-C).
    out_m = jax.block_until_ready(
        multimodal_fusion(visual_feat, textual_feat, params, force_mean_pool=True))
    assert jnp.allclose(out_m, ref, atol=1e-5, rtol=1e-5)

    # 3) Ragged tail: M=20 rows with an 8-row tile -> grid=3, last block partial;
    #    no rows dropped.
    B2, N2 = 5, 4
    vis2 = jax.random.normal(jax.random.PRNGKey(1), (B2, N2, C, H, W), jnp.float32)
    txt2 = jax.random.normal(jax.random.PRNGKey(2), (B2, N2, C), jnp.float32)
    out2 = jax.block_until_ready(multimodal_fusion(vis2, txt2, params, tm=8))
    ref2 = reference_fusion(vis2, txt2, params)
    assert out2.shape == (B2, N2, C)
    assert jnp.allclose(out2, ref2, atol=1e-5, rtol=1e-5)

    # 4) bf16 streaming (the ~2x HBM-traffic win): same math, f32 accumulation
    #    in-kernel, checked at a bf16-appropriate tolerance.
    vis_bf = visual_feat.astype(jnp.bfloat16)
    txt_bf = textual_feat.astype(jnp.bfloat16)
    out_bf = jax.block_until_ready(multimodal_fusion(vis_bf, txt_bf, params))
    ref_bf = reference_fusion(vis_bf, txt_bf, params)
    assert out_bf.dtype == jnp.bfloat16
    assert jnp.allclose(out_bf.astype(jnp.float32), ref_bf, atol=5e-2, rtol=5e-2)

    print("KERNEL_OK")
</pallas_src>

<mosaic_0001>
module attributes {stable_mosaic.version = 11 : i64} {
  func.func @fusion_kernel_fold(%arg0: i32, %arg1: memref<8x2048xf32, #tpu.memory_space<vmem>>, %arg2: memref<8x32xf32, #tpu.memory_space<vmem>>, %arg3: memref<2048x32xf32, #tpu.memory_space<vmem>>, %arg4: memref<1x32xf32, #tpu.memory_space<vmem>>, %arg5: memref<32x32xf32, #tpu.memory_space<vmem>>, %arg6: memref<1x32xf32, #tpu.memory_space<vmem>>, %arg7: memref<32x32xf32, #tpu.memory_space<vmem>>, %arg8: memref<32x32xf32, #tpu.memory_space<vmem>>, %arg9: memref<1x32xf32, #tpu.memory_space<vmem>>, %arg10: memref<8x32xf32, #tpu.memory_space<vmem>>) attributes {dimension_semantics = [#tpu.dimension_semantics<parallel>], iteration_bounds = array<i64: 1>, scalar_prefetch = 0 : i64, scratch_operands = 0 : i64, tpu.core_type = #tpu.core_type<tc>, window_params = [{transform_indices = @transform_0, window_bounds = array<i64: 8, 2048>}, {transform_indices = @transform_1, window_bounds = array<i64: 8, 32>}, {pipeline_mode = #tpu.pipeline_mode<synchronous>, transform_indices = @transform_2, window_bounds = array<i64: 2048, 32>}, {pipeline_mode = #tpu.pipeline_mode<synchronous>, transform_indices = @transform_3, window_bounds = array<i64: 1, 32>}, {pipeline_mode = #tpu.pipeline_mode<synchronous>, transform_indices = @transform_4, window_bounds = array<i64: 32, 32>}, {pipeline_mode = #tpu.pipeline_mode<synchronous>, transform_indices = @transform_5, window_bounds = array<i64: 1, 32>}, {pipeline_mode = #tpu.pipeline_mode<synchronous>, transform_indices = @transform_6, window_bounds = array<i64: 32, 32>}, {pipeline_mode = #tpu.pipeline_mode<synchronous>, transform_indices = @transform_7, window_bounds = array<i64: 32, 32>}, {pipeline_mode = #tpu.pipeline_mode<synchronous>, transform_indices = @transform_8, window_bounds = array<i64: 1, 32>}, {transform_indices = @transform_9, window_bounds = array<i64: 8, 32>}]} {
    %c0 = arith.constant 0 : index
    %c0_0 = arith.constant 0 : index
    %0 = vector.load %arg1[%c0, %c0_0] : memref<8x2048xf32, #tpu.memory_space<vmem>>, vector<8x2048xf32>
    %c0_1 = arith.constant 0 : index
    %c0_2 = arith.constant 0 : index
    %1 = vector.load %arg2[%c0_1, %c0_2] : memref<8x32xf32, #tpu.memory_space<vmem>>, vector<8x32xf32>
    %c0_3 = arith.constant 0 : index
    %c0_4 = arith.constant 0 : index
    %2 = vector.load %arg3[%c0_3, %c0_4] : memref<2048x32xf32, #tpu.memory_space<vmem>>, vector<2048x32xf32>
    %cst = arith.constant dense<0.000000e+00> : vector<8x32xf32>
    %3 = tpu.matmul %0, %2, %cst {dimension_numbers = #tpu.dot_dimension_numbers<[1], [0], [0], [1], [0, 0, 1, 1], [], []>} : vector<8x2048xf32>, vector<2048x32xf32>, vector<8x32xf32> -> vector<8x32xf32>
    %c0_5 = arith.constant 0 : index
    %c0_6 = arith.constant 0 : index
    %4 = vector.load %arg4[%c0_5, %c0_6] : memref<1x32xf32, #tpu.memory_space<vmem>>, vector<1x32xf32>
    %5 = vector.broadcast %4 : vector<1x32xf32> to vector<8x32xf32>
    %6 = arith.addf %3, %5 : vector<8x32xf32>
    %cst_7 = arith.constant 0.000000e+00 : f32
    %7 = vector.broadcast %cst_7 : f32 to vector<8x32xf32>
    %8 = arith.maximumf %6, %7 : vector<8x32xf32>
    %c0_8 = arith.constant 0 : index
    %c0_9 = arith.constant 0 : index
    %9 = vector.load %arg5[%c0_8, %c0_9] : memref<32x32xf32, #tpu.memory_space<vmem>>, vector<32x32xf32>
    %cst_10 = arith.constant dense<0.000000e+00> : vector<8x32xf32>
    %10 = tpu.matmul %1, %9, %cst_10 {dimension_numbers = #tpu.dot_dimension_numbers<[1], [0], [0], [1], [0, 0, 1, 1], [], []>} : vector<8x32xf32>, vector<32x32xf32>, vector<8x32xf32> -> vector<8x32xf32>
    %c0_11 = arith.constant 0 : index
    %c0_12 = arith.constant 0 : index
    %11 = vector.load %arg6[%c0_11, %c0_12] : memref<1x32xf32, #tpu.memory_space<vmem>>, vector<1x32xf32>
    %12 = vector.broadcast %11 : vector<1x32xf32> to vector<8x32xf32>
    %13 = arith.addf %10, %12 : vector<8x32xf32>
    %cst_13 = arith.constant 0.000000e+00 : f32
    %14 = vector.broadcast %cst_13 : f32 to vector<8x32xf32>
    %15 = arith.maximumf %13, %14 : vector<8x32xf32>
    %c0_14 = arith.constant 0 : index
    %c0_15 = arith.constant 0 : index
    %16 = vector.load %arg7[%c0_14, %c0_15] : memref<32x32xf32, #tpu.memory_space<vmem>>, vector<32x32xf32>
    %cst_16 = arith.constant dense<0.000000e+00> : vector<8x32xf32>
    %17 = tpu.matmul %8, %16, %cst_16 {dimension_numbers = #tpu.dot_dimension_numbers<[1], [0], [0], [1], [0, 0, 1, 1], [], []>} : vector<8x32xf32>, vector<32x32xf32>, vector<8x32xf32> -> vector<8x32xf32>
    %c0_17 = arith.constant 0 : index
    %c0_18 = arith.constant 0 : index
    %18 = vector.load %arg8[%c0_17, %c0_18] : memref<32x32xf32, #tpu.memory_space<vmem>>, vector<32x32xf32>
    %cst_19 = arith.constant dense<0.000000e+00> : vector<8x32xf32>
    %19 = tpu.matmul %15, %18, %cst_19 {dimension_numbers = #tpu.dot_dimension_numbers<[1], [0], [0], [1], [0, 0, 1, 1], [], []>} : vector<8x32xf32>, vector<32x32xf32>, vector<8x32xf32> -> vector<8x32xf32>
    %20 = arith.addf %17, %19 : vector<8x32xf32>
    %c0_20 = arith.constant 0 : index
    %c0_21 = arith.constant 0 : index
    %21 = vector.load %arg9[%c0_20, %c0_21] : memref<1x32xf32, #tpu.memory_space<vmem>>, vector<1x32xf32>
    %22 = vector.broadcast %21 : vector<1x32xf32> to vector<8x32xf32>
    %23 = arith.addf %20, %22 : vector<8x32xf32>
    %24 = arith.negf %23 : vector<8x32xf32>
    %25 = math.exp %24 : vector<8x32xf32>
    %cst_22 = arith.constant 1.000000e+00 : f32
    %26 = vector.broadcast %cst_22 : f32 to vector<8x32xf32>
    %27 = arith.addf %26, %25 : vector<8x32xf32>
    %28 = arith.divf %26, %27 : vector<8x32xf32>
    %29 = arith.mulf %28, %8 : vector<8x32xf32>
    %cst_23 = arith.constant 1.000000e+00 : f32
    %30 = vector.broadcast %cst_23 : f32 to vector<8x32xf32>
    %31 = arith.subf %30, %28 : vector<8x32xf32>
    %32 = arith.mulf %31, %15 : vector<8x32xf32>
    %33 = arith.addf %29, %32 : vector<8x32xf32>
    %c0_24 = arith.constant 0 : index
    %c0_25 = arith.constant 0 : index
    %34 = vector.load %arg10[%c0_24, %c0_25] : memref<8x32xf32, #tpu.memory_space<vmem>>, vector<8x32xf32>
    tpu.vector_store %arg10[%c0_24, %c0_25], %33 {strides = array<i32>} : memref<8x32xf32, #tpu.memory_space<vmem>>, vector<8x32xf32>,
    return
  }
  func.func @transform_0(%arg0: i32) -> (i32, i32) {
    %c0_i32 = arith.constant 0 : i32
    %c0_i32_0 = arith.constant 0 : i32
    return %arg0, %c0_i32 : i32, i32
  }
  func.func @transform_1(%arg0: i32) -> (i32, i32) {
    %c0_i32 = arith.constant 0 : i32
    %c0_i32_0 = arith.constant 0 : i32
    return %arg0, %c0_i32 : i32, i32
  }
  func.func @transform_2(%arg0: i32) -> (i32, i32) {
    %c0_i32 = arith.constant 0 : i32
    %c0_i32_0 = arith.constant 0 : i32
    %c0_i32_1 = arith.constant 0 : i32
    return %c0_i32, %c0_i32_0 : i32, i32
  }
  func.func @transform_3(%arg0: i32) -> (i32, i32) {
    %c0_i32 = arith.constant 0 : i32
    %c0_i32_0 = arith.constant 0 : i32
    %c0_i32_1 = arith.constant 0 : i32
    return %c0_i32, %c0_i32_0 : i32, i32
  }
  func.func @transform_4(%arg0: i32) -> (i32, i32) {
    %c0_i32 = arith.constant 0 : i32
    %c0_i32_0 = arith.constant 0 : i32
    %c0_i32_1 = arith.constant 0 : i32
    return %c0_i32, %c0_i32_0 : i32, i32
  }
  func.func @transform_5(%arg0: i32) -> (i32, i32) {
    %c0_i32 = arith.constant 0 : i32
    %c0_i32_0 = arith.constant 0 : i32
    %c0_i32_1 = arith.constant 0 : i32
    return %c0_i32, %c0_i32_0 : i32, i32
  }
  func.func @transform_6(%arg0: i32) -> (i32, i32) {
    %c0_i32 = arith.constant 0 : i32
    %c0_i32_0 = arith.constant 0 : i32
    %c0_i32_1 = arith.constant 0 : i32
    return %c0_i32, %c0_i32_0 : i32, i32
  }
  func.func @transform_7(%arg0: i32) -> (i32, i32) {
    %c0_i32 = arith.constant 0 : i32
    %c0_i32_0 = arith.constant 0 : i32
    %c0_i32_1 = arith.constant 0 : i32
    return %c0_i32, %c0_i32_0 : i32, i32
  }
  func.func @transform_8(%arg0: i32) -> (i32, i32) {
    %c0_i32 = arith.constant 0 : i32
    %c0_i32_0 = arith.constant 0 : i32
    %c0_i32_1 = arith.constant 0 : i32
    return %c0_i32, %c0_i32_0 : i32, i32
  }
  func.func @transform_9(%arg0: i32) -> (i32, i32) {
    %c0_i32 = arith.constant 0 : i32
    %c0_i32_0 = arith.constant 0 : i32
    return %arg0, %c0_i32 : i32, i32
  }
}

</mosaic_0001>

<llo_original>
// kernel: tpu_custom_call.1
$region0: #{tpu_custom_call.1}
  #allocation0 [shape = 'u32[]', space=smem, size = 0x4, offset = 0x4, fixed_abs, tag = 'smem constant byte address 0x4 - core index']
  #allocation1 [shape = 'u32[72,128]{1,0:T(1,128)}', space=vmem, size = 0x9000, scoped, tag = 'internal scratch']
  %s0 = inlined_call_operand.vmem [shape: f32[8,2048], index: 0, kind: input, shape index: {}]
  %s1 = inlined_call_operand.vmem [shape: f32[8,32], index: 1, kind: input, shape index: {}]
  %s2 = inlined_call_operand.vmem [shape: f32[2048,32], index: 2, kind: input, shape index: {}]
  %s3 = inlined_call_operand.vmem [shape: f32[1,32], index: 3, kind: input, shape index: {}]
  %s4 = inlined_call_operand.vmem [shape: f32[32,32], index: 4, kind: input, shape index: {}]
  %s5 = inlined_call_operand.vmem [shape: f32[1,32], index: 5, kind: input, shape index: {}]
  %s6 = inlined_call_operand.vmem [shape: f32[32,32], index: 6, kind: input, shape index: {}]
  %s7 = inlined_call_operand.vmem [shape: f32[32,32], index: 7, kind: input, shape index: {}]
  %s8 = inlined_call_operand.vmem [shape: f32[1,32], index: 8, kind: input, shape index: {}]
  %s9 = inlined_call_operand.hbm [shape: f32[8,32], index: 9, kind: output, shape index: {}]
  %s10 = sld [smem:[#allocation0]]
  $region46: #{tpu_custom_call.1} parent=0
    _
  %s12 = ssub.s32 1, %s10
  %s13 = scalar_select 0, %s12, %s10
  $region1: #{tpu_custom_call.1} parent=0
    #allocation2 [shape = 'u8[4096]{0}', space=vmem, size = 0x1000, scoped, tag = 'output window, operand 0, single buffered']
    #allocation3 [shape = 's32[1]{0}', space=sflag, size = 0x4, scoped, tag = 'scoped memory for tpu_custom_call.1']
    %14 = vsyncpa [#allocation3], 0
    // Predicated region
    $region2: #{tpu_custom_call.1} parent=1 // pred_check
      _
    $region3: #{tpu_custom_call.1} parent=1 // pred_check_branch
      %16 = sbr.rel (0) target = $region5
    $region4: #{tpu_custom_call.1} parent=1 // pred_region
      _
    $region5: #{tpu_custom_call.1} parent=1 // pred_fallthru
      _
    // Predicated region
    $region6: #{tpu_custom_call.1} parent=1 // pred_check
      _
    $region7: #{tpu_custom_call.1} parent=1 // pred_check_branch
      %18 = sbr.rel (0) target = $region9
    $region8: #{tpu_custom_call.1} parent=1 // pred_region
      _
    $region9: #{tpu_custom_call.1} parent=1 // pred_fallthru
      _
    // Predicated region
    $region10: #{tpu_custom_call.1} parent=1 // pred_check
      _
    $region11: #{tpu_custom_call.1} parent=1 // pred_check_branch
      %20 = sbr.rel (0) target = $region13
    $region12: #{tpu_custom_call.1} parent=1 // pred_region
      _
    $region13: #{tpu_custom_call.1} parent=1 // pred_fallthru
      _
    // Predicated region
    $region14: #{tpu_custom_call.1} parent=1 // pred_check
      _
    $region15: #{tpu_custom_call.1} parent=1 // pred_check_branch
      %22 = sbr.rel (0) target = $region17
    $region16: #{tpu_custom_call.1} parent=1 // pred_region
      _
    $region17: #{tpu_custom_call.1} parent=1 // pred_fallthru
      _
    // Predicated region
    $region18: #{tpu_custom_call.1} parent=1 // pred_check
      _
    $region19: #{tpu_custom_call.1} parent=1 // pred_check_branch
      %24 = sbr.rel (0) target = $region21
    $region20: #{tpu_custom_call.1} parent=1 // pred_region
      _
    $region21: #{tpu_custom_call.1} parent=1 // pred_fallthru
      _
    // Predicated region
    $region22: #{tpu_custom_call.1} parent=1 // pred_check
      _
    $region23: #{tpu_custom_call.1} parent=1 // pred_check_branch
      %26 = sbr.rel (0) target = $region25
    $region24: #{tpu_custom_call.1} parent=1 // pred_region
      _
    $region25: #{tpu_custom_call.1} parent=1 // pred_fallthru
      _
    // Predicated region
    $region26: #{tpu_custom_call.1} parent=1 // pred_check
      _
    $region27: #{tpu_custom_call.1} parent=1 // pred_check_branch
      %28 = sbr.rel (0) target = $region29
    $region28: #{tpu_custom_call.1} parent=1 // pred_region
      _
    $region29: #{tpu_custom_call.1} parent=1 // pred_fallthru
      _
    // Predicated region
    $region30: #{tpu_custom_call.1} parent=1 // pred_check
      _
    $region31: #{tpu_custom_call.1} parent=1 // pred_check_branch
      %30 = sbr.rel (0) target = $region33
    $region32: #{tpu_custom_call.1} parent=1 // pred_region
      _
    $region33: #{tpu_custom_call.1} parent=1 // pred_fallthru
      _
    // Predicated region
    $region34: #{tpu_custom_call.1} parent=1 // pred_check
      _
    $region35: #{tpu_custom_call.1} parent=1 // pred_check_branch
      %32 = sbr.rel (0) target = $region37
    $region36: #{tpu_custom_call.1} parent=1 // pred_region
      _
    $region37: #{tpu_custom_call.1} parent=1 // pred_fallthru
      _
    %v33 = vld [vmem:[%s0] sm:$0xff]
    %v34 = vld [vmem:[%s0 + $0x8] sm:$0xff]
    %v35 = vld [vmem:[%s0 + $0x10] sm:$0xff]
    %v36 = vld [vmem:[%s0 + $0x18] sm:$0xff]
    %v37 = vld [vmem:[%s0 + $0x20] sm:$0xff]
    %v38 = vld [vmem:[%s0 + $0x28] sm:$0xff]
    %v39 = vld [vmem:[%s0 + $0x30] sm:$0xff]
    %v40 = vld [vmem:[%s0 + $0x38] sm:$0xff]
    %v41 = vld [vmem:[%s0 + $0x40] sm:$0xff]
    %v42 = vld [vmem:[%s0 + $0x48] sm:$0xff]
    %v43 = vld [vmem:[%s0 + $0x50] sm:$0xff]
    %v44 = vld [vmem:[%s0 + $0x58] sm:$0xff]
    %v45 = vld [vmem:[%s0 + $0x60] sm:$0xff]
    %v46 = vld [vmem:[%s0 + $0x68] sm:$0xff]
    %v47 = vld [vmem:[%s0 + $0x70] sm:$0xff]
    %v48 = vld [vmem:[%s0 + $0x78] sm:$0xff]
    %v49 = vld [vmem:[%s1] sm:$0xff]
    %v50 = vld [vmem:[%s2] sm:$0xff]
    %v51 = vld [vmem:[%s2 + $0x8] sm:$0xff]
    %v52 = vld [vmem:[%s2 + $0x10] sm:$0xff]
    %v53 = vld [vmem:[%s2 + $0x18] sm:$0xff]
    %v54 = vld [vmem:[%s2 + $0x20] sm:$0xff]
    %v55 = vld [vmem:[%s2 + $0x28] sm:$0xff]
    %v56 = vld [vmem:[%s2 + $0x30] sm:$0xff]
    %v57 = vld [vmem:[%s2 + $0x38] sm:$0xff]
    %v58 = vld [vmem:[%s2 + $0x40] sm:$0xff]
    %v59 = vld [vmem:[%s2 + $0x48] sm:$0xff]
    %v60 = vld [vmem:[%s2 + $0x50] sm:$0xff]
    %v61 = vld [vmem:[%s2 + $0x58] sm:$0xff]
    %v62 = vld [vmem:[%s2 + $0x60] sm:$0xff]
    %v63 = vld [vmem:[%s2 + $0x68] sm:$0xff]
    %v64 = vld [vmem:[%s2 + $0x70] sm:$0xff]
    %v65 = vld [vmem:[%s2 + $0x78] sm:$0xff]
    %v66 = vld [vmem:[%s2 + $0x80] sm:$0xff]
    %v67 = vld [vmem:[%s2 + $0x88] sm:$0xff]
    %v68 = vld [vmem:[%s2 + $0x90] sm:$0xff]
    %v69 = vld [vmem:[%s2 + $0x98] sm:$0xff]
    %v70 = vld [vmem:[%s2 + $0xa0] sm:$0xff]
    %v71 = vld [vmem:[%s2 + $0xa8] sm:$0xff]
    %v72 = vld [vmem:[%s2 + $0xb0] sm:$0xff]
    %v73 = vld [vmem:[%s2 + $0xb8] sm:$0xff]
    %v74 = vld [vmem:[%s2 + $0xc0] sm:$0xff]
    %v75 = vld [vmem:[%s2 + $0xc8] sm:$0xff]
    %v76 = vld [vmem:[%s2 + $0xd0] sm:$0xff]
    %v77 = vld [vmem:[%s2 + $0xd8] sm:$0xff]
    %v78 = vld [vmem:[%s2 + $0xe0] sm:$0xff]
    %v79 = vld [vmem:[%s2 + $0xe8] sm:$0xff]
    %v80 = vld [vmem:[%s2 + $0xf0] sm:$0xff]
    %v81 = vld [vmem:[%s2 + $0xf8] sm:$0xff]
    %v82 = vld [vmem:[%s2 + $0x100] sm:$0xff]
    %v83 = vld [vmem:[%s2 + $0x108] sm:$0xff]
    %v84 = vld [vmem:[%s2 + $0x110] sm:$0xff]
    %v85 = vld [vmem:[%s2 + $0x118] sm:$0xff]
    %v86 = vld [vmem:[%s2 + $0x120] sm:$0xff]
    %v87 = vld [vmem:[%s2 + $0x128] sm:$0xff]
    %v88 = vld [vmem:[%s2 + $0x130] sm:$0xff]
    %v89 = vld [vmem:[%s2 + $0x138] sm:$0xff]
    %v90 = vld [vmem:[%s2 + $0x140] sm:$0xff]
    %v91 = vld [vmem:[%s2 + $0x148] sm:$0xff]
    %v92 = vld [vmem:[%s2 + $0x150] sm:$0xff]
    %v93 = vld [vmem:[%s2 + $0x158] sm:$0xff]
    %v94 = vld [vmem:[%s2 + $0x160] sm:$0xff]
    %v95 = vld [vmem:[%s2 + $0x168] sm:$0xff]
    %v96 = vld [vmem:[%s2 + $0x170] sm:$0xff]
    %v97 = vld [vmem:[%s2 + $0x178] sm:$0xff]
    %v98 = vld [vmem:[%s2 + $0x180] sm:$0xff]
    %v99 = vld [vmem:[%s2 + $0x188] sm:$0xff]
    %v100 = vld [vmem:[%s2 + $0x190] sm:$0xff]
    %v101 = vld [vmem:[%s2 + $0x198] sm:$0xff]
    %v102 = vld [vmem:[%s2 + $0x1a0] sm:$0xff]
    %v103 = vld [vmem:[%s2 + $0x1a8] sm:$0xff]
    %v104 = vld [vmem:[%s2 + $0x1b0] sm:$0xff]
    %v105 = vld [vmem:[%s2 + $0x1b8] sm:$0xff]
    %v106 = vld [vmem:[%s2 + $0x1c0] sm:$0xff]
    %v107 = vld [vmem:[%s2 + $0x1c8] sm:$0xff]
    %v108 = vld [vmem:[%s2 + $0x1d0] sm:$0xff]
    %v109 = vld [vmem:[%s2 + $0x1d8] sm:$0xff]
    %v110 = vld [vmem:[%s2 + $0x1e0] sm:$0xff]
    %v111 = vld [vmem:[%s2 + $0x1e8] sm:$0xff]
    %v112 = vld [vmem:[%s2 + $0x1f0] sm:$0xff]
    %v113 = vld [vmem:[%s2 + $0x1f8] sm:$0xff]
    %v114 = vld [vmem:[%s2 + $0x200] sm:$0xff]
    %v115 = vld [vmem:[%s2 + $0x208] sm:$0xff]
    %v116 = vld [vmem:[%s2 + $0x210] sm:$0xff]
    %v117 = vld [vmem:[%s2 + $0x218] sm:$0xff]
    %v118 = vld [vmem:[%s2 + $0x220] sm:$0xff]
    %v119 = vld [vmem:[%s2 + $0x228] sm:$0xff]
    %v120 = vld [vmem:[%s2 + $0x230] sm:$0xff]
    %v121 = vld [vmem:[%s2 + $0x238] sm:$0xff]
    %v122 = vld [vmem:[%s2 + $0x240] sm:$0xff]
    %v123 = vld [vmem:[%s2 + $0x248] sm:$0xff]
    %v124 = vld [vmem:[%s2 + $0x250] sm:$0xff]
    %v125 = vld [vmem:[%s2 + $0x258] sm:$0xff]
    %v126 = vld [vmem:[%s2 + $0x260] sm:$0xff]
    %v127 = vld [vmem:[%s2 + $0x268] sm:$0xff]
    %v128 = vld [vmem:[%s2 + $0x270] sm:$0xff]
    %v129 = vld [vmem:[%s2 + $0x278] sm:$0xff]
    %v130 = vld [vmem:[%s2 + $0x280] sm:$0xff]
    %v131 = vld [vmem:[%s2 + $0x288] sm:$0xff]
    %v132 = vld [vmem:[%s2 + $0x290] sm:$0xff]
    %v133 = vld [vmem:[%s2 + $0x298] sm:$0xff]
    %v134 = vld [vmem:[%s2 + $0x2a0] sm:$0xff]
    %v135 = vld [vmem:[%s2 + $0x2a8] sm:$0xff]
    %v136 = vld [vmem:[%s2 + $0x2b0] sm:$0xff]
    %v137 = vld [vmem:[%s2 + $0x2b8] sm:$0xff]
    %v138 = vld [vmem:[%s2 + $0x2c0] sm:$0xff]
    %v139 = vld [vmem:[%s2 + $0x2c8] sm:$0xff]
    %v140 = vld [vmem:[%s2 + $0x2d0] sm:$0xff]
    %v141 = vld [vmem:[%s2 + $0x2d8] sm:$0xff]
    %v142 = vld [vmem:[%s2 + $0x2e0] sm:$0xff]
    %v143 = vld [vmem:[%s2 + $0x2e8] sm:$0xff]
    %v144 = vld [vmem:[%s2 + $0x2f0] sm:$0xff]
    %v145 = vld [vmem:[%s2 + $0x2f8] sm:$0xff]
    %v146 = vld [vmem:[%s2 + $0x300] sm:$0xff]
    %v147 = vld [vmem:[%s2 + $0x308] sm:$0xff]
    %v148 = vld [vmem:[%s2 + $0x310] sm:$0xff]
    %v149 = vld [vmem:[%s2 + $0x318] sm:$0xff]
    %v150 = vld [vmem:[%s2 + $0x320] sm:$0xff]
    %v151 = vld [vmem:[%s2 + $0x328] sm:$0xff]
    %v152 = vld [vmem:[%s2 + $0x330] sm:$0xff]
    %v153 = vld [vmem:[%s2 + $0x338] sm:$0xff]
    %v154 = vld [vmem:[%s2 + $0x340] sm:$0xff]
    %v155 = vld [vmem:[%s2 + $0x348] sm:$0xff]
    %v156 = vld [vmem:[%s2 + $0x350] sm:$0xff]
    %v157 = vld [vmem:[%s2 + $0x358] sm:$0xff]
    %v158 = vld [vmem:[%s2 + $0x360] sm:$0xff]
    %v159 = vld [vmem:[%s2 + $0x368] sm:$0xff]
    %v160 = vld [vmem:[%s2 + $0x370] sm:$0xff]
    %v161 = vld [vmem:[%s2 + $0x378] sm:$0xff]
    %v162 = vld [vmem:[%s2 + $0x380] sm:$0xff]
    %v163 = vld [vmem:[%s2 + $0x388] sm:$0xff]
    %v164 = vld [vmem:[%s2 + $0x390] sm:$0xff]
    %v165 = vld [vmem:[%s2 + $0x398] sm:$0xff]
    %v166 = vld [vmem:[%s2 + $0x3a0] sm:$0xff]
    %v167 = vld [vmem:[%s2 + $0x3a8] sm:$0xff]
    %v168 = vld [vmem:[%s2 + $0x3b0] sm:$0xff]
    %v169 = vld [vmem:[%s2 + $0x3b8] sm:$0xff]
    %v170 = vld [vmem:[%s2 + $0x3c0] sm:$0xff]
    %v171 = vld [vmem:[%s2 + $0x3c8] sm:$0xff]
    %v172 = vld [vmem:[%s2 + $0x3d0] sm:$0xff]
    %v173 = vld [vmem:[%s2 + $0x3d8] sm:$0xff]
    %v174 = vld [vmem:[%s2 + $0x3e0] sm:$0xff]
    %v175 = vld [vmem:[%s2 + $0x3e8] sm:$0xff]
    %v176 = vld [vmem:[%s2 + $0x3f0] sm:$0xff]
    %v177 = vld [vmem:[%s2 + $0x3f8] sm:$0xff]
    %v178 = vld [vmem:[%s2 + $0x400] sm:$0xff]
    %v179 = vld [vmem:[%s2 + $0x408] sm:$0xff]
    %v180 = vld [vmem:[%s2 + $0x410] sm:$0xff]
    %v181 = vld [vmem:[%s2 + $0x418] sm:$0xff]
    %v182 = vld [vmem:[%s2 + $0x420] sm:$0xff]
    %v183 = vld [vmem:[%s2 + $0x428] sm:$0xff]
    %v184 = vld [vmem:[%s2 + $0x430] sm:$0xff]
    %v185 = vld [vmem:[%s2 + $0x438] sm:$0xff]
    %v186 = vld [vmem:[%s2 + $0x440] sm:$0xff]
    %v187 = vld [vmem:[%s2 + $0x448] sm:$0xff]
    %v188 = vld [vmem:[%s2 + $0x450] sm:$0xff]
    %v189 = vld [vmem:[%s2 + $0x458] sm:$0xff]
    %v190 = vld [vmem:[%s2 + $0x460] sm:$0xff]
    %v191 = vld [vmem:[%s2 + $0x468] sm:$0xff]
    %v192 = vld [vmem:[%s2 + $0x470] sm:$0xff]
    %v193 = vld [vmem:[%s2 + $0x478] sm:$0xff]
    %v194 = vld [vmem:[%s2 + $0x480] sm:$0xff]
    %v195 = vld [vmem:[%s2 + $0x488] sm:$0xff]
    %v196 = vld [vmem:[%s2 + $0x490] sm:$0xff]
    %v197 = vld [vmem:[%s2 + $0x498] sm:$0xff]
    %v198 = vld [vmem:[%s2 + $0x4a0] sm:$0xff]
    %v199 = vld [vmem:[%s2 + $0x4a8] sm:$0xff]
    %v200 = vld [vmem:[%s2 + $0x4b0] sm:$0xff]
    %v201 = vld [vmem:[%s2 + $0x4b8] sm:$0xff]
    %v202 = vld [vmem:[%s2 + $0x4c0] sm:$0xff]
    %v203 = vld [vmem:[%s2 + $0x4c8] sm:$0xff]
    %v204 = vld [vmem:[%s2 + $0x4d0] sm:$0xff]
    %v205 = vld [vmem:[%s2 + $0x4d8] sm:$0xff]
    %v206 = vld [vmem:[%s2 + $0x4e0] sm:$0xff]
    %v207 = vld [vmem:[%s2 + $0x4e8] sm:$0xff]
    %v208 = vld [vmem:[%s2 + $0x4f0] sm:$0xff]
    %v209 = vld [vmem:[%s2 + $0x4f8] sm:$0xff]
    %v210 = vld [vmem:[%s2 + $0x500] sm:$0xff]
    %v211 = vld [vmem:[%s2 + $0x508] sm:$0xff]
    %v212 = vld [vmem:[%s2 + $0x510] sm:$0xff]
    %v213 = vld [vmem:[%s2 + $0x518] sm:$0xff]
    %v214 = vld [vmem:[%s2 + $0x520] sm:$0xff]
    %v215 = vld [vmem:[%s2 + $0x528] sm:$0xff]
    %v216 = vld [vmem:[%s2 + $0x530] sm:$0xff]
    %v217 = vld [vmem:[%s2 + $0x538] sm:$0xff]
    %v218 = vld [vmem:[%s2 + $0x540] sm:$0xff]
    %v219 = vld [vmem:[%s2 + $0x548] sm:$0xff]
    %v220 = vld [vmem:[%s2 + $0x550] sm:$0xff]
    %v221 = vld [vmem:[%s2 + $0x558] sm:$0xff]
    %v222 = vld [vmem:[%s2 + $0x560] sm:$0xff]
    %v223 = vld [vmem:[%s2 + $0x568] sm:$0xff]
    %v224 = vld [vmem:[%s2 + $0x570] sm:$0xff]
    %v225 = vld [vmem:[%s2 + $0x578] sm:$0xff]
    %v226 = vld [vmem:[%s2 + $0x580] sm:$0xff]
    %v227 = vld [vmem:[%s2 + $0x588] sm:$0xff]
    %v228 = vld [vmem:[%s2 + $0x590] sm:$0xff]
    %v229 = vld [vmem:[%s2 + $0x598] sm:$0xff]
    %v230 = vld [vmem:[%s2 + $0x5a0] sm:$0xff]
    %v231 = vld [vmem:[%s2 + $0x5a8] sm:$0xff]
    %v232 = vld [vmem:[%s2 + $0x5b0] sm:$0xff]
    %v233 = vld [vmem:[%s2 + $0x5b8] sm:$0xff]
    %v234 = vld [vmem:[%s2 + $0x5c0] sm:$0xff]
    %v235 = vld [vmem:[%s2 + $0x5c8] sm:$0xff]
    %v236 = vld [vmem:[%s2 + $0x5d0] sm:$0xff]
    %v237 = vld [vmem:[%s2 + $0x5d8] sm:$0xff]
    %v238 = vld [vmem:[%s2 + $0x5e0] sm:$0xff]
    %v239 = vld [vmem:[%s2 + $0x5e8] sm:$0xff]
    %v240 = vld [vmem:[%s2 + $0x5f0] sm:$0xff]
    %v241 = vld [vmem:[%s2 + $0x5f8] sm:$0xff]
    %v242 = vld [vmem:[%s2 + $0x600] sm:$0xff]
    %v243 = vld [vmem:[%s2 + $0x608] sm:$0xff]
    %v244 = vld [vmem:[%s2 + $0x610] sm:$0xff]
    %v245 = vld [vmem:[%s2 + $0x618] sm:$0xff]
    %v246 = vld [vmem:[%s2 + $0x620] sm:$0xff]
    %v247 = vld [vmem:[%s2 + $0x628] sm:$0xff]
    %v248 = vld [vmem:[%s2 + $0x630] sm:$0xff]
    %v249 = vld [vmem:[%s2 + $0x638] sm:$0xff]
    %v250 = vld [vmem:[%s2 + $0x640] sm:$0xff]
    %v251 = vld [vmem:[%s2 + $0x648] sm:$0xff]
    %v252 = vld [vmem:[%s2 + $0x650] sm:$0xff]
    %v253 = vld [vmem:[%s2 + $0x658] sm:$0xff]
    %v254 = vld [vmem:[%s2 + $0x660] sm:$0xff]
    %v255 = vld [vmem:[%s2 + $0x668] sm:$0xff]
    %v256 = vld [vmem:[%s2 + $0x670] sm:$0xff]
    %v257 = vld [vmem:[%s2 + $0x678] sm:$0xff]
    %v258 = vld [vmem:[%s2 + $0x680] sm:$0xff]
    %v259 = vld [vmem:[%s2 + $0x688] sm:$0xff]
    %v260 = vld [vmem:[%s2 + $0x690] sm:$0xff]
    %v261 = vld [vmem:[%s2 + $0x698] sm:$0xff]
    %v262 = vld [vmem:[%s2 + $0x6a0] sm:$0xff]
    %v263 = vld [vmem:[%s2 + $0x6a8] sm:$0xff]
    %v264 = vld [vmem:[%s2 + $0x6b0] sm:$0xff]
    %v265 = vld [vmem:[%s2 + $0x6b8] sm:$0xff]
    %v266 = vld [vmem:[%s2 + $0x6c0] sm:$0xff]
    %v267 = vld [vmem:[%s2 + $0x6c8] sm:$0xff]
    %v268 = vld [vmem:[%s2 + $0x6d0] sm:$0xff]
    %v269 = vld [vmem:[%s2 + $0x6d8] sm:$0xff]
    %v270 = vld [vmem:[%s2 + $0x6e0] sm:$0xff]
    %v271 = vld [vmem:[%s2 + $0x6e8] sm:$0xff]
    %v272 = vld [vmem:[%s2 + $0x6f0] sm:$0xff]
    %v273 = vld [vmem:[%s2 + $0x6f8] sm:$0xff]
    %v274 = vld [vmem:[%s2 + $0x700] sm:$0xff]
    %v275 = vld [vmem:[%s2 + $0x708] sm:$0xff]
    %v276 = vld [vmem:[%s2 + $0x710] sm:$0xff]
    %v277 = vld [vmem:[%s2 + $0x718] sm:$0xff]
    %v278 = vld [vmem:[%s2 + $0x720] sm:$0xff]
    %v279 = vld [vmem:[%s2 + $0x728] sm:$0xff]
    %v280 = vld [vmem:[%s2 + $0x730] sm:$0xff]
    %v281 = vld [vmem:[%s2 + $0x738] sm:$0xff]
    %v282 = vld [vmem:[%s2 + $0x740] sm:$0xff]
    %v283 = vld [vmem:[%s2 + $0x748] sm:$0xff]
    %v284 = vld [vmem:[%s2 + $0x750] sm:$0xff]
    %v285 = vld [vmem:[%s2 + $0x758] sm:$0xff]
    %v286 = vld [vmem:[%s2 + $0x760] sm:$0xff]
    %v287 = vld [vmem:[%s2 + $0x768] sm:$0xff]
    %v288 = vld [vmem:[%s2 + $0x770] sm:$0xff]
    %v289 = vld [vmem:[%s2 + $0x778] sm:$0xff]
    %v290 = vld [vmem:[%s2 + $0x780] sm:$0xff]
    %v291 = vld [vmem:[%s2 + $0x788] sm:$0xff]
    %v292 = vld [vmem:[%s2 + $0x790] sm:$0xff]
    %v293 = vld [vmem:[%s2 + $0x798] sm:$0xff]
    %v294 = vld [vmem:[%s2 + $0x7a0] sm:$0xff]
    %v295 = vld [vmem:[%s2 + $0x7a8] sm:$0xff]
    %v296 = vld [vmem:[%s2 + $0x7b0] sm:$0xff]
    %v297 = vld [vmem:[%s2 + $0x7b8] sm:$0xff]
    %v298 = vld [vmem:[%s2 + $0x7c0] sm:$0xff]
    %v299 = vld [vmem:[%s2 + $0x7c8] sm:$0xff]
    %v300 = vld [vmem:[%s2 + $0x7d0] sm:$0xff]
    %v301 = vld [vmem:[%s2 + $0x7d8] sm:$0xff]
    %v302 = vld [vmem:[%s2 + $0x7e0] sm:$0xff]
    %v303 = vld [vmem:[%s2 + $0x7e8] sm:$0xff]
    %v304 = vld [vmem:[%s2 + $0x7f0] sm:$0xff]
    %v305 = vld [vmem:[%s2 + $0x7f8] sm:$0xff]
    %v306 = vld [vmem:[%s3] sm:$0x1]
    %v308 = vperm.slane %v306, 0
    %310 = vmatpush.msra.mxu0 %v65
    %311 = vmatpush.msra.mxu0 %v64
    %312 = vmatpush.msra.mxu0 %v63
    %313 = vmatpush.msra.mxu0 %v62
    %314 = vmatpush.msra.mxu0 %v61
    %315 = vmatpush.msra.mxu0 %v60
    %316 = vmatpush.msra.mxu0 %v59
    %317 = vmatpush.msra.mxu0 %v58
    %318 = vmatpush.msra.mxu0 %v57
    %319 = vmatpush.msra.mxu0 %v56
    %320 = vmatpush.msra.mxu0 %v55
    %321 = vmatpush.msra.mxu0 %v54
    %322 = vmatpush.msra.mxu0 %v53
    %323 = vmatpush.msra.mxu0 %v52
    %324 = vmatpush.msra.mxu0 %v51
    %325 = vmatpush.msra.mxu0 %v50
    %326 = vmatmul.f32.gmra.mxu0 %v33
    %v327 = vpop.f32.mrf.mxu0
    %v328 = vadd.f32 %v308, %v327
    %329 = vdwg.mxu0
    %330 = vmatpush.msra.mxu0 %v81
    %331 = vmatpush.msra.mxu0 %v80
    %332 = vmatpush.msra.mxu0 %v79
    %333 = vmatpush.msra.mxu0 %v78
    %334 = vmatpush.msra.mxu0 %v77
    %335 = vmatpush.msra.mxu0 %v76
    %336 = vmatpush.msra.mxu0 %v75
    %337 = vmatpush.msra.mxu0 %v74
    %338 = vmatpush.msra.mxu0 %v73
    %339 = vmatpush.msra.mxu0 %v72
    %340 = vmatpush.msra.mxu0 %v71
    %341 = vmatpush.msra.mxu0 %v70
    %342 = vmatpush.msra.mxu0 %v69
    %343 = vmatpush.msra.mxu0 %v68
    %344 = vmatpush.msra.mxu0 %v67
    %345 = vmatpush.msra.mxu0 %v66
    %346 = vmatmul.f32.gmra.mxu0 %v34
    %v347 = vpop.f32.mrf.mxu0
    %v348 = vadd.f32 %v328, %v347
    %349 = vdwg.mxu0
    %350 = vmatpush.msra.mxu0 %v97
    %351 = vmatpush.msra.mxu0 %v96
    %352 = vmatpush.msra.mxu0 %v95
    %353 = vmatpush.msra.mxu0 %v94
    %354 = vmatpush.msra.mxu0 %v93
    %355 = vmatpush.msra.mxu0 %v92
    %356 = vmatpush.msra.mxu0 %v91
    %357 = vmatpush.msra.mxu0 %v90
    %358 = vmatpush.msra.mxu0 %v89
    %359 = vmatpush.msra.mxu0 %v88
    %360 = vmatpush.msra.mxu0 %v87
    %361 = vmatpush.msra.mxu0 %v86
    %362 = vmatpush.msra.mxu0 %v85
    %363 = vmatpush.msra.mxu0 %v84
    %364 = vmatpush.msra.mxu0 %v83
    %365 = vmatpush.msra.mxu0 %v82
    %366 = vmatmul.f32.gmra.mxu0 %v35
    %v367 = vpop.f32.mrf.mxu0
    %v368 = vadd.f32 %v348, %v367
    %369 = vdwg.mxu0
    %370 = vmatpush.msra.mxu0 %v113
    %371 = vmatpush.msra.mxu0 %v112
    %372 = vmatpush.msra.mxu0 %v111
    %373 = vmatpush.msra.mxu0 %v110
    %374 = vmatpush.msra.mxu0 %v109
    %375 = vmatpush.msra.mxu0 %v108
    %376 = vmatpush.msra.mxu0 %v107
    %377 = vmatpush.msra.mxu0 %v106
    %378 = vmatpush.msra.mxu0 %v105
    %379 = vmatpush.msra.mxu0 %v104
    %380 = vmatpush.msra.mxu0 %v103
    %381 = vmatpush.msra.mxu0 %v102
    %382 = vmatpush.msra.mxu0 %v101
    %383 = vmatpush.msra.mxu0 %v100
    %384 = vmatpush.msra.mxu0 %v99
    %385 = vmatpush.msra.mxu0 %v98
    %386 = vmatmul.f32.gmra.mxu0 %v36
    %v387 = vpop.f32.mrf.mxu0
    %v388 = vadd.f32 %v368, %v387
    %389 = vdwg.mxu0
    %390 = vmatpush.msra.mxu0 %v129
    %391 = vmatpush.msra.mxu0 %v128
    %392 = vmatpush.msra.mxu0 %v127
    %393 = vmatpush.msra.mxu0 %v126
    %394 = vmatpush.msra.mxu0 %v125
    %395 = vmatpush.msra.mxu0 %v124
    %396 = vmatpush.msra.mxu0 %v123
    %397 = vmatpush.msra.mxu0 %v122
    %398 = vmatpush.msra.mxu0 %v121
    %399 = vmatpush.msra.mxu0 %v120
    %400 = vmatpush.msra.mxu0 %v119
    %401 = vmatpush.msra.mxu0 %v118
    %402 = vmatpush.msra.mxu0 %v117
    %403 = vmatpush.msra.mxu0 %v116
    %404 = vmatpush.msra.mxu0 %v115
    %405 = vmatpush.msra.mxu0 %v114
    %406 = vmatmul.f32.gmra.mxu0 %v37
    %v407 = vpop.f32.mrf.mxu0
    %v408 = vadd.f32 %v388, %v407
    %409 = vdwg.mxu0
    %410 = vmatpush.msra.mxu0 %v145
    %411 = vmatpush.msra.mxu0 %v144
    %412 = vmatpush.msra.mxu0 %v143
    %413 = vmatpush.msra.mxu0 %v142
    %414 = vmatpush.msra.mxu0 %v141
    %415 = vmatpush.msra.mxu0 %v140
    %416 = vmatpush.msra.mxu0 %v139
    %417 = vmatpush.msra.mxu0 %v138
    %418 = vmatpush.msra.mxu0 %v137
    %419 = vmatpush.msra.mxu0 %v136
    %420 = vmatpush.msra.mxu0 %v135
    %421 = vmatpush.msra.mxu0 %v134
    %422 = vmatpush.msra.mxu0 %v133
    %423 = vmatpush.msra.mxu0 %v132
    %424 = vmatpush.msra.mxu0 %v131
    %425 = vmatpush.msra.mxu0 %v130
    %426 = vmatmul.f32.gmra.mxu0 %v38
    %v427 = vpop.f32.mrf.mxu0
    %v428 = vadd.f32 %v408, %v427
    %429 = vdwg.mxu0
    %430 = vmatpush.msra.mxu0 %v161
    %431 = vmatpush.msra.mxu0 %v160
    %432 = vmatpush.msra.mxu0 %v159
    %433 = vmatpush.msra.mxu0 %v158
    %434 = vmatpush.msra.mxu0 %v157
    %435 = vmatpush.msra.mxu0 %v156
    %436 = vmatpush.msra.mxu0 %v155
    %437 = vmatpush.msra.mxu0 %v154
    %438 = vmatpush.msra.mxu0 %v153
    %439 = vmatpush.msra.mxu0 %v152
    %440 = vmatpush.msra.mxu0 %v151
    %441 = vmatpush.msra.mxu0 %v150
    %442 = vmatpush.msra.mxu0 %v149
    %443 = vmatpush.msra.mxu0 %v148
    %444 = vmatpush.msra.mxu0 %v147
    %445 = vmatpush.msra.mxu0 %v146
    %446 = vmatmul.f32.gmra.mxu0 %v39
    %v447 = vpop.f32.mrf.mxu0
    %v448 = vadd.f32 %v428, %v447
    %449 = vdwg.mxu0
    %450 = vmatpush.msra.mxu0 %v177
    %451 = vmatpush.msra.mxu0 %v176
    %452 = vmatpush.msra.mxu0 %v175
    %453 = vmatpush.msra.mxu0 %v174
    %454 = vmatpush.msra.mxu0 %v173
    %455 = vmatpush.msra.mxu0 %v172
    %456 = vmatpush.msra.mxu0 %v171
    %457 = vmatpush.msra.mxu0 %v170
    %458 = vmatpush.msra.mxu0 %v169
    %459 = vmatpush.msra.mxu0 %v168
    %460 = vmatpush.msra.mxu0 %v167
    %461 = vmatpush.msra.mxu0 %v166
    %462 = vmatpush.msra.mxu0 %v165
    %463 = vmatpush.msra.mxu0 %v164
    %464 = vmatpush.msra.mxu0 %v163
    %465 = vmatpush.msra.mxu0 %v162
    %466 = vmatmul.f32.gmra.mxu0 %v40
    %v467 = vpop.f32.mrf.mxu0
    %v468 = vadd.f32 %v448, %v467
    %469 = vdwg.mxu0
    %470 = vmatpush.msra.mxu0 %v193
    %471 = vmatpush.msra.mxu0 %v192
    %472 = vmatpush.msra.mxu0 %v191
    %473 = vmatpush.msra.mxu0 %v190
    %474 = vmatpush.msra.mxu0 %v189
    %475 = vmatpush.msra.mxu0 %v188
    %476 = vmatpush.msra.mxu0 %v187
    %477 = vmatpush.msra.mxu0 %v186
    %478 = vmatpush.msra.mxu0 %v185
    %479 = vmatpush.msra.mxu0 %v184
    %480 = vmatpush.msra.mxu0 %v183
    %481 = vmatpush.msra.mxu0 %v182
    %482 = vmatpush.msra.mxu0 %v181
    %483 = vmatpush.msra.mxu0 %v180
    %484 = vmatpush.msra.mxu0 %v179
    %485 = vmatpush.msra.mxu0 %v178
    %486 = vmatmul.f32.gmra.mxu0 %v41
    %v487 = vpop.f32.mrf.mxu0
    %v488 = vadd.f32 %v468, %v487
    %489 = vdwg.mxu0
    %490 = vmatpush.msra.mxu0 %v209
    %491 = vmatpush.msra.mxu0 %v208
    %492 = vmatpush.msra.mxu0 %v207
    %493 = vmatpush.msra.mxu0 %v206
    %494 = vmatpush.msra.mxu0 %v205
    %495 = vmatpush.msra.mxu0 %v204
    %496 = vmatpush.msra.mxu0 %v203
    %497 = vmatpush.msra.mxu0 %v202
    %498 = vmatpush.msra.mxu0 %v201
    %499 = vmatpush.msra.mxu0 %v200
    %500 = vmatpush.msra.mxu0 %v199
    %501 = vmatpush.msra.mxu0 %v198
    %502 = vmatpush.msra.mxu0 %v197
    %503 = vmatpush.msra.mxu0 %v196
    %504 = vmatpush.msra.mxu0 %v195
    %505 = vmatpush.msra.mxu0 %v194
    %506 = vmatmul.f32.gmra.mxu0 %v42
    %v507 = vpop.f32.mrf.mxu0
    %v508 = vadd.f32 %v488, %v507
    %509 = vdwg.mxu0
    %510 = vmatpush.msra.mxu0 %v225
    %511 = vmatpush.msra.mxu0 %v224
    %512 = vmatpush.msra.mxu0 %v223
    %513 = vmatpush.msra.mxu0 %v222
    %514 = vmatpush.msra.mxu0 %v221
    %515 = vmatpush.msra.mxu0 %v220
    %516 = vmatpush.msra.mxu0 %v219
    %517 = vmatpush.msra.mxu0 %v218
    %518 = vmatpush.msra.mxu0 %v217
    %519 = vmatpush.msra.mxu0 %v216
    %520 = vmatpush.msra.mxu0 %v215
    %521 = vmatpush.msra.mxu0 %v214
    %522 = vmatpush.msra.mxu0 %v213
    %523 = vmatpush.msra.mxu0 %v212
    %524 = vmatpush.msra.mxu0 %v211
    %525 = vmatpush.msra.mxu0 %v210
    %526 = vmatmul.f32.gmra.mxu0 %v43
    %v527 = vpop.f32.mrf.mxu0
    %v528 = vadd.f32 %v508, %v527
    %529 = vdwg.mxu0
    %530 = vmatpush.msra.mxu0 %v241
    %531 = vmatpush.msra.mxu0 %v240
    %532 = vmatpush.msra.mxu0 %v239
    %533 = vmatpush.msra.mxu0 %v238
    %534 = vmatpush.msra.mxu0 %v237
    %535 = vmatpush.msra.mxu0 %v236
    %536 = vmatpush.msra.mxu0 %v235
    %537 = vmatpush.msra.mxu0 %v234
    %538 = vmatpush.msra.mxu0 %v233
    %539 = vmatpush.msra.mxu0 %v232
    %540 = vmatpush.msra.mxu0 %v231
    %541 = vmatpush.msra.mxu0 %v230
    %542 = vmatpush.msra.mxu0 %v229
    %543 = vmatpush.msra.mxu0 %v228
    %544 = vmatpush.msra.mxu0 %v227
    %545 = vmatpush.msra.mxu0 %v226
    %546 = vmatmul.f32.gmra.mxu0 %v44
    %v547 = vpop.f32.mrf.mxu0
    %v548 = vadd.f32 %v528, %v547
    %549 = vdwg.mxu0
    %550 = vmatpush.msra.mxu0 %v257
    %551 = vmatpush.msra.mxu0 %v256
    %552 = vmatpush.msra.mxu0 %v255
    %553 = vmatpush.msra.mxu0 %v254
    %554 = vmatpush.msra.mxu0 %v253
    %555 = vmatpush.msra.mxu0 %v252
    %556 = vmatpush.msra.mxu0 %v251
    %557 = vmatpush.msra.mxu0 %v250
    %558 = vmatpush.msra.mxu0 %v249
    %559 = vmatpush.msra.mxu0 %v248
    %560 = vmatpush.msra.mxu0 %v247
    %561 = vmatpush.msra.mxu0 %v246
    %562 = vmatpush.msra.mxu0 %v245
    %563 = vmatpush.msra.mxu0 %v244
    %564 = vmatpush.msra.mxu0 %v243
    %565 = vmatpush.msra.mxu0 %v242
    %566 = vmatmul.f32.gmra.mxu0 %v45
    %v567 = vpop.f32.mrf.mxu0
    %v568 = vadd.f32 %v548, %v567
    %569 = vdwg.mxu0
    %570 = vmatpush.msra.mxu0 %v273
    %571 = vmatpush.msra.mxu0 %v272
    %572 = vmatpush.msra.mxu0 %v271
    %573 = vmatpush.msra.mxu0 %v270
    %574 = vmatpush.msra.mxu0 %v269
    %575 = vmatpush.msra.mxu0 %v268
    %576 = vmatpush.msra.mxu0 %v267
    %577 = vmatpush.msra.mxu0 %v266
    %578 = vmatpush.msra.mxu0 %v265
    %579 = vmatpush.msra.mxu0 %v264
    %580 = vmatpush.msra.mxu0 %v263
    %581 = vmatpush.msra.mxu0 %v262
    %582 = vmatpush.msra.mxu0 %v261
    %583 = vmatpush.msra.mxu0 %v260
    %584 = vmatpush.msra.mxu0 %v259
    %585 = vmatpush.msra.mxu0 %v258
    %586 = vmatmul.f32.gmra.mxu0 %v46
    %v587 = vpop.f32.mrf.mxu0
    %v588 = vadd.f32 %v568, %v587
    %589 = vdwg.mxu0
    %590 = vmatpush.msra.mxu0 %v289
    %591 = vmatpush.msra.mxu0 %v288
    %592 = vmatpush.msra.mxu0 %v287
    %593 = vmatpush.msra.mxu0 %v286
    %594 = vmatpush.msra.mxu0 %v285
    %595 = vmatpush.msra.mxu0 %v284
    %596 = vmatpush.msra.mxu0 %v283
    %597 = vmatpush.msra.mxu0 %v282
    %598 = vmatpush.msra.mxu0 %v281
    %599 = vmatpush.msra.mxu0 %v280
    %600 = vmatpush.msra.mxu0 %v279
    %601 = vmatpush.msra.mxu0 %v278
    %602 = vmatpush.msra.mxu0 %v277
    %603 = vmatpush.msra.mxu0 %v276
    %604 = vmatpush.msra.mxu0 %v275
    %605 = vmatpush.msra.mxu0 %v274
    %606 = vmatmul.f32.gmra.mxu0 %v47
    %v607 = vpop.f32.mrf.mxu0
    %v608 = vadd.f32 %v588, %v607
    %609 = vdwg.mxu0
    %610 = vmatpush.msra.mxu0 %v305
    %611 = vmatpush.msra.mxu0 %v304
    %612 = vmatpush.msra.mxu0 %v303
    %613 = vmatpush.msra.mxu0 %v302
    %614 = vmatpush.msra.mxu0 %v301
    %615 = vmatpush.msra.mxu0 %v300
    %616 = vmatpush.msra.mxu0 %v299
    %617 = vmatpush.msra.mxu0 %v298
    %618 = vmatpush.msra.mxu0 %v297
    %619 = vmatpush.msra.mxu0 %v296
    %620 = vmatpush.msra.mxu0 %v295
    %621 = vmatpush.msra.mxu0 %v294
    %622 = vmatpush.msra.mxu0 %v293
    %623 = vmatpush.msra.mxu0 %v292
    %624 = vmatpush.msra.mxu0 %v291
    %625 = vmatpush.msra.mxu0 %v290
    %626 = vmatmul.f32.gmra.mxu0 %v48
    %v627 = vpop.f32.mrf.mxu0
    %v628 = vadd.f32 %v608, %v627
    %629 = vdwg.mxu0
    %v630 = vmax.f32 %v628, 0.0
    %v631 = vld [vmem:[%s4] sm:$0xff]
    %v632 = vld [vmem:[%s4 + $0x8] sm:$0xff]
    %v633 = vld [vmem:[%s4 + $0x10] sm:$0xff]
    %v634 = vld [vmem:[%s4 + $0x18] sm:$0xff]
    %v635 = vld [vmem:[%s5] sm:$0x1]
    %v637 = vperm.slane %v635, 0
    %vm639 = vcmask 261120
    %v641 = vsel %vm639, %v49, 0
    %643 = vmatpush.msra.mxu0 0.0
    %644 = vmatpush.msra.mxu0 0.0
    %645 = vmatpush.msra.mxu0 0.0
    %646 = vmatpush.msra.mxu0 0.0
    %647 = vmatpush.msra.mxu0 0.0
    %648 = vmatpush.msra.mxu0 0.0
    %649 = vmatpush.msra.mxu0 0.0
    %650 = vmatpush.msra.mxu0 0.0
    %651 = vmatpush.msra.mxu0 0.0
    %652 = vmatpush.msra.mxu0 0.0
    %653 = vmatpush.msra.mxu0 0.0
    %654 = vmatpush.msra.mxu0 0.0
    %655 = vmatpush.msra.mxu0 %v634
    %656 = vmatpush.msra.mxu0 %v633
    %657 = vmatpush.msra.mxu0 %v632
    %658 = vmatpush.msra.mxu0 %v631
    %659 = vmatmul.f32.gmra.mxu0 %v641
    %v660 = vpop.f32.mrf.mxu0
    %v661 = vadd.f32 %v637, %v660
    %662 = vdwg.mxu0
    %v663 = vmax.f32 %v661, 0.0
    %v664 = vld [vmem:[%s6] sm:$0xff]
    %v665 = vld [vmem:[%s6 + $0x8] sm:$0xff]
    %v666 = vld [vmem:[%s6 + $0x10] sm:$0xff]
    %v667 = vld [vmem:[%s6 + $0x18] sm:$0xff]
    %v668 = vld [vmem:[%s7] sm:$0xff]
    %v669 = vld [vmem:[%s7 + $0x8] sm:$0xff]
    %v670 = vld [vmem:[%s7 + $0x10] sm:$0xff]
    %v671 = vld [vmem:[%s7 + $0x18] sm:$0xff]
    %v673 = vsel %vm639, %v663, 0
    %675 = vmatpush.msra.mxu0 0.0
    %676 = vmatpush.msra.mxu0 0.0
    %677 = vmatpush.msra.mxu0 0.0
    %678 = vmatpush.msra.mxu0 0.0
    %679 = vmatpush.msra.mxu0 0.0
    %680 = vmatpush.msra.mxu0 0.0
    %681 = vmatpush.msra.mxu0 0.0
    %682 = vmatpush.msra.mxu0 0.0
    %683 = vmatpush.msra.mxu0 0.0
    %684 = vmatpush.msra.mxu0 0.0
    %685 = vmatpush.msra.mxu0 0.0
    %686 = vmatpush.msra.mxu0 0.0
    %687 = vmatpush.msra.mxu0 %v671
    %688 = vmatpush.msra.mxu0 %v670
    %689 = vmatpush.msra.mxu0 %v669
    %690 = vmatpush.msra.mxu0 %v668
    %691 = vmatmul.f32.gmra.mxu0 %v673
    %v692 = vpop.f32.mrf.mxu0
    %v693 = vadd.f32 0.0, %v692
    %694 = vdwg.mxu0
    %v696 = vsel %vm639, %v630, 0
    %698 = vmatpush.msra.mxu0 0.0
    %699 = vmatpush.msra.mxu0 0.0
    %700 = vmatpush.msra.mxu0 0.0
    %701 = vmatpush.msra.mxu0 0.0
    %702 = vmatpush.msra.mxu0 0.0
    %703 = vmatpush.msra.mxu0 0.0
    %704 = vmatpush.msra.mxu0 0.0
    %705 = vmatpush.msra.mxu0 0.0
    %706 = vmatpush.msra.mxu0 0.0
    %707 = vmatpush.msra.mxu0 0.0
    %708 = vmatpush.msra.mxu0 0.0
    %709 = vmatpush.msra.mxu0 0.0
    %710 = vmatpush.msra.mxu0 %v667
    %711 = vmatpush.msra.mxu0 %v666
    %712 = vmatpush.msra.mxu0 %v665
    %713 = vmatpush.msra.mxu0 %v664
    %714 = vmatmul.f32.gmra.mxu0 %v696
    %v715 = vpop.f32.mrf.mxu0
    %v716 = vadd.f32 %v693, %v715
    %717 = vdwg.mxu0
    %v718 = vld [vmem:[%s8] sm:$0x1]
    %v720 = vperm.slane %v718, 0
    %v722 = vadd.f32 %v716, %v720
    %v723 = vxor.u32 %v722, 2147483648
    %v724 = vmul.f32 %v723, 1.442695
    %v725 = vpow.pop %v724
    %v726 = vadd.f32 %v725, 1.0
    %v727 = vrcp.pop %v726
    %v728 = vmul.f32 %v726, %v727
    %v729 = vsub.f32 1.0, %v728
    %v730 = vmul.f32 %v727, %v729
    %v731 = vadd.f32 %v727, %v730
    %vm732 = vweird.f32 %v726
    %vm733 = vweird.f32 %v727
    %vm734 = vmor %vm732, %vm733
    %v735 = vsel %vm734, %v727, %v731
    %v736 = vand.u32 2147483647, %v726
    %vm737 = vcmp.eq.f32.partialorder %v736, 8.507059e+37
    %v738 = vand.u32 %v726, 2147483648
    %v739 = vor.u32 1.1754944e-38, %v738
    %v740 = vsel %vm737, %v739, %v735
    %v741 = vmul.f32 1.0, %v740
    %v742 = vmul.f32 %v741, %v630
    %v743 = vsub.f32 1.0, %v741
    %v744 = vmul.f32 %v743, %v663
    %v745 = vadd.f32 %v742, %v744
    %746 = vst.msk [vmem:[#allocation2] sm:$0xff] %vm639, %v745
    // Predicated region
    $region38: #{tpu_custom_call.1} parent=1 // pred_check
      _
    $region39: #{tpu_custom_call.1} parent=1 // pred_check_branch
      %748 = sbr.rel (0) target = $region41
    $region40: #{tpu_custom_call.1} parent=1 // pred_region
      %750 = vsyncadd [#allocation3], 0
      %s752 = sshll.u32 [#allocation2], 4
      %s753 = int_to_ptr.vmem [resolvable:$true] %s752
      %s754 = sshll.u32 %s9, 4
      %s755 = int_to_ptr.hbm [resolvable:$true] %s754
      %757 = dma.vmem_to_hbm [thread:$0]  %s753, 128, %s755, [#allocation3]
    $region41: #{tpu_custom_call.1} parent=1 // pred_fallthru
      _
    // Predicated region
    $region42: #{tpu_custom_call.1} parent=1 // pred_check
      _
    $region43: #{tpu_custom_call.1} parent=1 // pred_check_branch
      %759 = sbr.rel (0) target = $region45
    $region44: #{tpu_custom_call.1} parent=1 // pred_region
      %761 = dma.done [#allocation3], 128
    $region45: #{tpu_custom_call.1} parent=1 // pred_fallthru
      _
    %762 = vsyncpa [#allocation3], 1

</llo_original>
